<compile_context>
chip_gen: v7x
topology: tpu7x:2x2x1
jax: 0.10.0
libtpu: 0.0.40
codegen_flags: <defaults>
</compile_context>

<pallas_src>
import jax
import jax.numpy as jnp
from jax.experimental import pallas as pl
from jax.experimental.pallas import tpu as pltpu

B    = 8     # batch
DIN  = 64    # fc3 input features
DOUT = 2     # fc3 output features

LEAKY_SLOPE = 0.01   # PyTorch LeakyReLU default negative_slope


def head5_kernel(x_ref, wT_ref, b_ref, o_ref):
    # ---- fc3: (B, DIN) @ (DIN, DOUT) + bias, f32 accumulation on the MXU ----
    h = jnp.dot(x_ref[...], wT_ref[...], preferred_element_type=jnp.float32)
    h = h + b_ref[...]                       # bias row broadcast over batch

    # ---- LeakyReLU (negative_slope = 0.01) ----
    h = jnp.where(h > 0, h, LEAKY_SLOPE * h)

    # ---- Dropout ----
    # TODO(synk): training-mode Dropout(p=0.5) would need pltpu.prng_* masking;
    # eval-mode dropout is the identity, which is what we implement here.
    o_ref[...] = h


def head5_forward(x, wT, b2):
    """x: (B, 64) f32; wT: (64, 2) persistent pre-transposed weight; b2: (1, 2)."""
    vmem = pl.BlockSpec(memory_space=pltpu.MemorySpace.VMEM)

    return pl.pallas_call(
        head5_kernel,
        out_shape=jax.ShapeDtypeStruct((B, DOUT), jnp.float32),
        in_specs=[vmem, vmem, vmem],   # x, W^T, bias — whole arrays in VMEM
        out_specs=vmem,
    )(x, wT, b2)


def head5_reference(x, w, b):
    h = x @ w.T + b
    return jnp.where(h > 0, h, LEAKY_SLOPE * h)


if __name__ == "__main__":
    key = jax.random.PRNGKey(0)
    kx, kw, kb = jax.random.split(key, 3)

    # PyTorch-style Linear init: U(-1/sqrt(fan_in), 1/sqrt(fan_in)).
    bound = 1.0 / (DIN ** 0.5)
    x = jax.random.normal(kx, (B, DIN), dtype=jnp.float32)
    w = jax.random.uniform(kw, (DOUT, DIN), minval=-bound, maxval=bound,
                           dtype=jnp.float32)
    b = jax.random.uniform(kb, (DOUT,), minval=-bound, maxval=bound,
                           dtype=jnp.float32)

    # One-time parameter prep (done at init, NOT per forward call).
    wT = jnp.asarray(w.T)          # (64, 2) persistent layout
    b2 = b.reshape(1, DOUT)        # (1, 2)

    out = head5_forward(x, wT, b2)
    jax.block_until_ready(out)

    ref = head5_reference(x, w, b)
    assert out.shape == (B, DOUT)
    assert jnp.allclose(out, ref, rtol=1e-4, atol=1e-4), "mismatch vs reference"

    print("KERNEL_OK")
</pallas_src>

<mosaic_0001>
module attributes {stable_mosaic.version = 11 : i64} {
  func.func @head5_kernel(%arg0: memref<8x64xf32, #tpu.memory_space<vmem>>, %arg1: memref<64x2xf32, #tpu.memory_space<vmem>>, %arg2: memref<1x2xf32, #tpu.memory_space<vmem>>, %arg3: memref<8x2xf32, #tpu.memory_space<vmem>>) attributes {dimension_semantics = [], scalar_prefetch = 0 : i64, scratch_operands = 0 : i64, tpu.core_type = #tpu.core_type<tc>} {
    %c0 = arith.constant 0 : index
    %c0_0 = arith.constant 0 : index
    %0 = vector.load %arg0[%c0, %c0_0] : memref<8x64xf32, #tpu.memory_space<vmem>>, vector<8x64xf32>
    %c0_1 = arith.constant 0 : index
    %c0_2 = arith.constant 0 : index
    %1 = vector.load %arg1[%c0_1, %c0_2] : memref<64x2xf32, #tpu.memory_space<vmem>>, vector<64x2xf32>
    %cst = arith.constant dense<0.000000e+00> : vector<8x2xf32>
    %2 = tpu.matmul %0, %1, %cst {dimension_numbers = #tpu.dot_dimension_numbers<[1], [0], [0], [1], [0, 0, 1, 1], [], []>} : vector<8x64xf32>, vector<64x2xf32>, vector<8x2xf32> -> vector<8x2xf32>
    %c0_3 = arith.constant 0 : index
    %c0_4 = arith.constant 0 : index
    %3 = vector.load %arg2[%c0_3, %c0_4] : memref<1x2xf32, #tpu.memory_space<vmem>>, vector<1x2xf32>
    %4 = vector.broadcast %3 : vector<1x2xf32> to vector<8x2xf32>
    %5 = arith.addf %2, %4 : vector<8x2xf32>
    %cst_5 = arith.constant 0.000000e+00 : f32
    %6 = vector.broadcast %cst_5 : f32 to vector<8x2xf32>
    %7 = arith.cmpf ogt, %5, %6 : vector<8x2xf32>
    %cst_6 = arith.constant 0.00999999977 : f32
    %8 = vector.broadcast %cst_6 : f32 to vector<8x2xf32>
    %9 = arith.mulf %8, %5 : vector<8x2xf32>
    %10 = arith.select %7, %5, %9 : vector<8x2xi1>, vector<8x2xf32>
    %c0_7 = arith.constant 0 : index
    %c0_8 = arith.constant 0 : index
    %11 = vector.load %arg3[%c0_7, %c0_8] : memref<8x2xf32, #tpu.memory_space<vmem>>, vector<8x2xf32>
    tpu.vector_store %arg3[%c0_7, %c0_8], %10 {strides = array<i32>} : memref<8x2xf32, #tpu.memory_space<vmem>>, vector<8x2xf32>,
    return
  }
}

</mosaic_0001>

<llo_original>
// kernel: tpu_custom_call.1
$region0: #{tpu_custom_call.1}
  #allocation0 [shape = 'u32[]', space=smem, size = 0x4, offset = 0x4, fixed_abs, tag = 'smem constant byte address 0x4 - core index']
  #allocation1 [shape = 'u32[144,128]{1,0:T(1,128)}', space=vmem, size = 0x12000, scoped, tag = 'internal scratch']
  %s0 = inlined_call_operand.vmem [shape: f32[8,64], index: 0, kind: input, shape index: {}]
  %s1 = inlined_call_operand.vmem [shape: f32[64,2], index: 1, kind: input, shape index: {}]
  %s2 = inlined_call_operand.vmem [shape: f32[1,2], index: 2, kind: input, shape index: {}]
  %s3 = inlined_call_operand.vmem [shape: f32[8,2], index: 3, kind: output, shape index: {}]
  %s4 = sld [smem:[#allocation0]]
  $region22: #{tpu_custom_call.1} parent=0
    _
  %s6 = ssub.s32 1, %s4
  %s7 = scalar_select 0, %s6, %s4
  // Predicated region
  $region2: #{tpu_custom_call.1} parent=0 // pred_check
    _
  $region3: #{tpu_custom_call.1} parent=0 // pred_check_branch
    %9 = sbr.rel (0) target = $region5
  $region4: #{tpu_custom_call.1} parent=0 // pred_region
    _
  $region5: #{tpu_custom_call.1} parent=0 // pred_fallthru
    _
  // Predicated region
  $region6: #{tpu_custom_call.1} parent=0 // pred_check
    _
  $region7: #{tpu_custom_call.1} parent=0 // pred_check_branch
    %11 = sbr.rel (0) target = $region9
  $region8: #{tpu_custom_call.1} parent=0 // pred_region
    _
  $region9: #{tpu_custom_call.1} parent=0 // pred_fallthru
    _
  // Predicated region
  $region10: #{tpu_custom_call.1} parent=0 // pred_check
    _
  $region11: #{tpu_custom_call.1} parent=0 // pred_check_branch
    %13 = sbr.rel (0) target = $region13
  $region12: #{tpu_custom_call.1} parent=0 // pred_region
    _
  $region13: #{tpu_custom_call.1} parent=0 // pred_fallthru
    _
  %v14 = vld [vmem:[%s0] sm:$0xff]
  %v15 = vld [vmem:[%s1] sm:$0xff]
  %v16 = vld [vmem:[%s1 + $0x8] sm:$0xff]
  %v17 = vld [vmem:[%s1 + $0x10] sm:$0xff]
  %v18 = vld [vmem:[%s1 + $0x18] sm:$0xff]
  %v19 = vld [vmem:[%s1 + $0x20] sm:$0xff]
  %v20 = vld [vmem:[%s1 + $0x28] sm:$0xff]
  %v21 = vld [vmem:[%s1 + $0x30] sm:$0xff]
  %v22 = vld [vmem:[%s1 + $0x38] sm:$0xff]
  %v23 = vld [vmem:[%s2] sm:$0x1]
  %v25 = vlaneseq
  %v26 = vshrl.u32 %v25, 7
  %v27 = vsub.s32 0, %v26
  %v28 = vrot.slane %v23, %v27
  %vm30 = vcmask 523264
  %v32 = vsel %vm30, %v14, 0
  %34 = vmatprep.subr.mxu0 0.0
  %35 = vmatpush1.msra.mxu0 %v15
  %36 = vmatprep.subr.mxu0 0.0
  %37 = vmatpush1.msra.mxu0 %v16
  %38 = vmatprep.subr.mxu0 0.0
  %39 = vmatpush1.msra.mxu0 %v17
  %40 = vmatprep.subr.mxu0 0.0
  %41 = vmatpush1.msra.mxu0 %v18
  %42 = vmatprep.subr.mxu0 0.0
  %43 = vmatpush1.msra.mxu0 %v19
  %44 = vmatprep.subr.mxu0 0.0
  %45 = vmatpush1.msra.mxu0 %v20
  %46 = vmatprep.subr.mxu0 0.0
  %47 = vmatpush1.msra.mxu0 %v21
  %48 = vmatprep.subr.mxu0 0.0
  %49 = vmatpush1.msra.mxu0 %v22
  %50 = vmatprep.subr.mxu0 0.0
  %51 = vmatpush1.msra.mxu0 0.0
  %52 = vmatprep.subr.mxu0 0.0
  %53 = vmatpush1.msra.mxu0 0.0
  %54 = vmatprep.subr.mxu0 0.0
  %55 = vmatpush1.msra.mxu0 0.0
  %56 = vmatprep.subr.mxu0 0.0
  %57 = vmatpush1.msra.mxu0 0.0
  %58 = vmatprep.subr.mxu0 0.0
  %59 = vmatpush1.msra.mxu0 0.0
  %60 = vmatprep.subr.mxu0 0.0
  %61 = vmatpush1.msra.mxu0 0.0
  %62 = vmatprep.subr.mxu0 0.0
  %63 = vmatpush1.msra.mxu0 0.0
  %64 = vmatprep.subr.mxu0 0.0
  %65 = vmatpush1.msra.mxu0 0.0
  %66 = vmatprep.subr.mxu0 0.0
  %67 = vmatpush1.msra.mxu0 0.0
  %68 = vmatprep.subr.mxu0 0.0
  %69 = vmatpush1.msra.mxu0 0.0
  %70 = vmatprep.subr.mxu0 0.0
  %71 = vmatpush1.msra.mxu0 0.0
  %72 = vmatprep.subr.mxu0 0.0
  %73 = vmatpush1.msra.mxu0 0.0
  %74 = vmatprep.subr.mxu0 0.0
  %75 = vmatpush1.msra.mxu0 0.0
  %76 = vmatprep.subr.mxu0 0.0
  %77 = vmatpush1.msra.mxu0 0.0
  %78 = vmatprep.subr.mxu0 0.0
  %79 = vmatpush1.msra.mxu0 0.0
  %80 = vmatprep.subr.mxu0 0.0
  %81 = vmatpush1.msra.mxu0 0.0
  %82 = vmatprep.subr.mxu0 0.0
  %83 = vmatpush1.msra.mxu0 0.0
  %84 = vmatprep.subr.mxu0 0.0
  %85 = vmatpush1.msra.mxu0 0.0
  %86 = vmatprep.subr.mxu0 0.0
  %87 = vmatpush1.msra.mxu0 0.0
  %88 = vmatprep.subr.mxu0 0.0
  %89 = vmatpush1.msra.mxu0 0.0
  %90 = vmatprep.subr.mxu0 0.0
  %91 = vmatpush1.msra.mxu0 0.0
  %92 = vmatprep.subr.mxu0 0.0
  %93 = vmatpush1.msra.mxu0 0.0
  %94 = vmatprep.subr.mxu0 0.0
  %95 = vmatpush1.msra.mxu0 0.0
  %96 = vmatprep.subr.mxu0 0.0
  %97 = vmatpush1.msra.mxu0 0.0
  %98 = vmatprep.mubr.f32.mxu0 0.0
  %99 = vmatmul.mubr.f32.gmra.mrb[0].mxu0 %v32
  %v100 = vpop.f32.mrb[0].mxu0
  %v101 = vadd.f32 %v28, %v100
  %v102 = vpop.f32.mrb[0].mxu0
  %103 = vdwg.mxu0
  %vm104 = vcmp.gt.f32.partialorder %v101, 0.0
  %v105 = vmul.f32 %v101, 0.01
  %v106 = vsel %vm104, %v101, %v105
  %vm107 = vcmask 15360
  %108 = vst.msk [vmem:[%s3] sm:$0xff] %vm107, %v106
  // Predicated region
  $region14: #{tpu_custom_call.1} parent=0 // pred_check
    _
  $region15: #{tpu_custom_call.1} parent=0 // pred_check_branch
    %110 = sbr.rel (0) target = $region17
  $region16: #{tpu_custom_call.1} parent=0 // pred_region
    _
  $region17: #{tpu_custom_call.1} parent=0 // pred_fallthru
    _
  // Predicated region
  $region18: #{tpu_custom_call.1} parent=0 // pred_check
    _
  $region19: #{tpu_custom_call.1} parent=0 // pred_check_branch
    %112 = sbr.rel (0) target = $region21
  $region20: #{tpu_custom_call.1} parent=0 // pred_region
    _
  $region21: #{tpu_custom_call.1} parent=0 // pred_fallthru
    _

</llo_original>
